<compile_context>
chip_gen: v7x
topology: tpu7x:2x2x1
jax: 0.10.0
libtpu: 0.0.40
codegen_flags: <defaults>
</compile_context>

<pallas_src>
import functools

import numpy as np
import jax
import jax.numpy as jnp
from jax.experimental import pallas as pl
from jax.experimental.pallas import tpu as pltpu

CHANNELS = (9, 32, 32, 1)      # channels[-1] must be 1, as in the PyTorch module
NUM_JOINTS = 23
C0 = CHANNELS[0]               # input channels per joint
C_MID = CHANNELS[-2]           # channels of internal_outputs
JC0 = NUM_JOINTS * C0          # 207  (lane-dense input width)
CJ = C_MID * NUM_JOINTS        # 736  (lane-dense internal width, (C, J) order)


def _round_up(x, m):
    return (x + m - 1) // m * m


def pose_disc_kernel(x_ref, wf_ref, bf_ref, wo_ref, bo_ref, out_ref, feat_ref):
    # x_ref: (tb, 207) f32 batch tile, joints*channels merged into lanes.
    xb = x_ref[...].astype(jnp.bfloat16)

    # Fused conv_0 ∘ conv_1 (both 1x1, no activation in between), applied to
    # all 23 joints at once via the block-structured weight (207, 736).
    # Column order of the result is (C_MID, J), i.e. already the flattened
    # NCHW internal_outputs layout.
    feat = (jnp.dot(xb, wf_ref[...], preferred_element_type=jnp.float32)
            + bf_ref[...])
    feat_ref[...] = feat.astype(feat_ref.dtype)

    # 23 per-joint Linear(C_MID -> 1) heads, folded onto the input and laid
    # out as a block-diagonal (207, 23) weight -> one more tiny MXU matmul.
    out = (jnp.dot(xb, wo_ref[...], preferred_element_type=jnp.float32)
           + bo_ref[...])
    out_ref[...] = out.astype(out_ref.dtype)


@functools.partial(jax.jit, static_argnames=("tile_b", "internal_dtype"))
def pose_discriminator(x, params, tile_b=1024, internal_dtype=jnp.float32):
    B, J, c0 = x.shape
    assert J == NUM_JOINTS and c0 == C0

    w1, b1 = params["w1"], params["b1"]        # (C1, C0), (C1,)
    w2, b2 = params["w2"], params["b2"]        # (C_MID, C1), (C_MID,)
    wfc, bfc = params["wfc"], params["bfc"]    # (J, C_MID), (J,)

    # ---- tiny wrapper-side weight prep (once per call) ---------------------
    P = jax.lax.Precision.HIGHEST
    wc = jnp.matmul(w2, w1, precision=P)              # (C_MID, C0)  fused convs
    bc = jnp.matmul(w2, b1, precision=P) + b2         # (C_MID,)
    wout = jnp.matmul(wfc, wc, precision=P)           # (J, C0)      folded fc heads
    cout = jnp.matmul(wfc, bc, precision=P) + bfc     # (J,)

    eye_j = jnp.eye(J, dtype=jnp.float32)
    # W_feat[j*C0+k, c*J+j'] = wc[c,k] * delta(j, j')      -> (207, 736)
    w_feat = jnp.einsum("ck,jm->jkcm", wc, eye_j).reshape(JC0, CJ)
    b_feat = jnp.repeat(bc, J).reshape(1, CJ)            # bias per (c, j) column
    # W_out[j*C0+k, j'] = wout[j,k] * delta(j, j')         -> (207, 23)
    w_out = jnp.einsum("jk,jm->jkm", wout, eye_j).reshape(JC0, J)
    b_out = cout.reshape(1, J)

    # ---- batch tiling -------------------------------------------------------
    # tb must be a multiple of 8 OR equal to the full batch dim.
    tb_req = max(8, _round_up(tile_b, 8))
    tb = B if B <= tb_req else tb_req
    nb = pl.cdiv(B, tb)                       # last tile may be ragged (masked)

    x2 = x.reshape(B, JC0).astype(jnp.float32)

    feat_bytes = np.dtype(internal_dtype).itemsize
    cost = pl.CostEstimate(
        flops=2 * B * JC0 * (CJ + J),
        transcendentals=0,
        bytes_accessed=(B * JC0 * 4            # x
                        + B * J * 4            # out
                        + B * CJ * feat_bytes  # internal features (dominant)
                        + JC0 * CJ * 2 + JC0 * J * 2 + (CJ + J) * 4),
    )

    out, feat = pl.pallas_call(
        pose_disc_kernel,
        grid=(nb,),
        in_specs=[
            # batch-tiled, lane-dense input
            pl.BlockSpec((tb, JC0), lambda i: (i, 0)),
            # weights / biases: constant block index -> fetched once, VMEM-resident
            pl.BlockSpec((JC0, CJ), lambda i: (0, 0)),
            pl.BlockSpec((1, CJ), lambda i: (0, 0)),
            pl.BlockSpec((JC0, J), lambda i: (0, 0)),
            pl.BlockSpec((1, J), lambda i: (0, 0)),
        ],
        out_specs=(
            pl.BlockSpec((tb, J), lambda i: (i, 0)),
            pl.BlockSpec((tb, CJ), lambda i: (i, 0)),
        ),
        out_shape=(
            jax.ShapeDtypeStruct((B, J), jnp.float32),
            jax.ShapeDtypeStruct((B, CJ), internal_dtype),
        ),
        compiler_params=pltpu.CompilerParams(
            dimension_semantics=("parallel",),
            vmem_limit_bytes=32 * 1024 * 1024,
        ),
        cost_estimate=cost,
    )(
        x2,
        w_feat.astype(jnp.bfloat16),
        b_feat.astype(jnp.float32),
        w_out.astype(jnp.bfloat16),
        b_out.astype(jnp.float32),
    )

    # (B, 736) with (C, J)-ordered columns -> PyTorch NCHW (B, C_MID, 1, 23):
    # a pure reshape, no transpose / extra HBM pass.
    internal = feat.reshape(B, C_MID, 1, NUM_JOINTS)
    return out, internal


def init_params(key):
    c0, c1, c2 = CHANNELS[0], CHANNELS[1], CHANNELS[2]
    ks = jax.random.split(key, 6)
    s = 0.1
    return {
        # conv_0: Conv2d(c0, c1, k=1) -> weight (c1, c0), bias (c1,)
        "w1": s * jax.random.normal(ks[0], (c1, c0), jnp.float32),
        "b1": s * jax.random.normal(ks[1], (c1,), jnp.float32),
        # conv_1: Conv2d(c1, c2, k=1)
        "w2": s * jax.random.normal(ks[2], (c2, c1), jnp.float32),
        "b2": s * jax.random.normal(ks[3], (c2,), jnp.float32),
        # 23 x Linear(c2, 1): stacked weights (23, c2), biases (23,)
        "wfc": s * jax.random.normal(ks[4], (NUM_JOINTS, c2), jnp.float32),
        "bfc": s * jax.random.normal(ks[5], (NUM_JOINTS,), jnp.float32),
    }


def reference(x, params):
    # pure-JAX f32 reference of the PyTorch forward (unfused path)
    P = jax.lax.Precision.HIGHEST
    h = jnp.einsum("bjk,ck->bjc", x, params["w1"], precision=P) + params["b1"]
    f = jnp.einsum("bjc,dc->bjd", h, params["w2"], precision=P) + params["b2"]
    out = jnp.einsum("bjc,jc->bj", f, params["wfc"], precision=P) + params["bfc"]
    internal = jnp.transpose(f, (0, 2, 1))[:, :, None, :]      # (B, C_MID, 1, 23)
    return out, internal


if __name__ == "__main__":
    key = jax.random.PRNGKey(0)
    kx, kp = jax.random.split(key)
    params = init_params(kp)

    # Small shape consistent with the module: (batch=2, joints=23, channels=9).
    B = 2
    x = jax.random.normal(kx, (B, NUM_JOINTS, C0), jnp.float32)
    out, internal = pose_discriminator(x, params)
    jax.block_until_ready((out, internal))

    ref_out, ref_internal = reference(x, params)
    assert out.shape == (B, NUM_JOINTS)
    assert internal.shape == (B, C_MID, 1, NUM_JOINTS)
    # Both outputs go through bf16 MXU matmuls -> bf16-level tolerances.
    assert jnp.allclose(out, ref_out, atol=1e-2), "fc output mismatch"
    assert jnp.allclose(internal, ref_internal, atol=2e-2), "internal mismatch"

    # Exercise the multi-tile grid with a ragged last tile (no padding, no
    # output slicing in the wrapper).
    B2 = 20
    x_big = jax.random.normal(jax.random.PRNGKey(1), (B2, NUM_JOINTS, C0),
                              jnp.float32)
    out2, internal2 = pose_discriminator(x_big, params, tile_b=8)
    jax.block_until_ready((out2, internal2))
    ref_out2, ref_internal2 = reference(x_big, params)
    assert jnp.allclose(out2, ref_out2, atol=1e-2), "gridded fc output mismatch"
    assert jnp.allclose(internal2, ref_internal2, atol=2e-2), "gridded internal mismatch"

    print("KERNEL_OK")
</pallas_src>

<mosaic_0001>
module attributes {stable_mosaic.version = 11 : i64} {
  func.func @pose_disc_kernel(%arg0: i32, %arg1: memref<2x207xf32, #tpu.memory_space<vmem>>, %arg2: memref<207x736xbf16, #tpu.memory_space<vmem>>, %arg3: memref<1x736xf32, #tpu.memory_space<vmem>>, %arg4: memref<207x23xbf16, #tpu.memory_space<vmem>>, %arg5: memref<1x23xf32, #tpu.memory_space<vmem>>, %arg6: memref<2x23xf32, #tpu.memory_space<vmem>>, %arg7: memref<2x736xf32, #tpu.memory_space<vmem>>) attributes {dimension_semantics = [#tpu.dimension_semantics<parallel>], iteration_bounds = array<i64: 1>, scalar_prefetch = 0 : i64, scratch_operands = 0 : i64, tpu.core_type = #tpu.core_type<tc>, window_params = [{transform_indices = @transform_0, window_bounds = array<i64: 2, 207>}, {pipeline_mode = #tpu.pipeline_mode<synchronous>, transform_indices = @transform_1, window_bounds = array<i64: 207, 736>}, {pipeline_mode = #tpu.pipeline_mode<synchronous>, transform_indices = @transform_2, window_bounds = array<i64: 1, 736>}, {pipeline_mode = #tpu.pipeline_mode<synchronous>, transform_indices = @transform_3, window_bounds = array<i64: 207, 23>}, {pipeline_mode = #tpu.pipeline_mode<synchronous>, transform_indices = @transform_4, window_bounds = array<i64: 1, 23>}, {transform_indices = @transform_5, window_bounds = array<i64: 2, 23>}, {transform_indices = @transform_6, window_bounds = array<i64: 2, 736>}]} {
    %c0 = arith.constant 0 : index
    %c0_0 = arith.constant 0 : index
    %0 = vector.load %arg1[%c0, %c0_0] : memref<2x207xf32, #tpu.memory_space<vmem>>, vector<2x207xf32>
    %1 = arith.truncf %0 : vector<2x207xf32> to vector<2x207xbf16>
    %c0_1 = arith.constant 0 : index
    %c0_2 = arith.constant 0 : index
    %2 = vector.load %arg2[%c0_1, %c0_2] : memref<207x736xbf16, #tpu.memory_space<vmem>>, vector<207x736xbf16>
    %cst = arith.constant dense<0.000000e+00> : vector<2x736xf32>
    %3 = tpu.matmul %1, %2, %cst {dimension_numbers = #tpu.dot_dimension_numbers<[1], [0], [0], [1], [0, 0, 1, 1], [], []>} : vector<2x207xbf16>, vector<207x736xbf16>, vector<2x736xf32> -> vector<2x736xf32>
    %c0_3 = arith.constant 0 : index
    %c0_4 = arith.constant 0 : index
    %4 = vector.load %arg3[%c0_3, %c0_4] : memref<1x736xf32, #tpu.memory_space<vmem>>, vector<1x736xf32>
    %5 = vector.broadcast %4 : vector<1x736xf32> to vector<2x736xf32>
    %6 = arith.addf %3, %5 : vector<2x736xf32>
    %c0_5 = arith.constant 0 : index
    %c0_6 = arith.constant 0 : index
    %7 = vector.load %arg7[%c0_5, %c0_6] : memref<2x736xf32, #tpu.memory_space<vmem>>, vector<2x736xf32>
    tpu.vector_store %arg7[%c0_5, %c0_6], %6 {strides = array<i32>} : memref<2x736xf32, #tpu.memory_space<vmem>>, vector<2x736xf32>,
    %c0_7 = arith.constant 0 : index
    %c0_8 = arith.constant 0 : index
    %8 = vector.load %arg4[%c0_7, %c0_8] : memref<207x23xbf16, #tpu.memory_space<vmem>>, vector<207x23xbf16>
    %cst_9 = arith.constant dense<0.000000e+00> : vector<2x23xf32>
    %9 = tpu.matmul %1, %8, %cst_9 {dimension_numbers = #tpu.dot_dimension_numbers<[1], [0], [0], [1], [0, 0, 1, 1], [], []>} : vector<2x207xbf16>, vector<207x23xbf16>, vector<2x23xf32> -> vector<2x23xf32>
    %c0_10 = arith.constant 0 : index
    %c0_11 = arith.constant 0 : index
    %10 = vector.load %arg5[%c0_10, %c0_11] : memref<1x23xf32, #tpu.memory_space<vmem>>, vector<1x23xf32>
    %11 = vector.broadcast %10 : vector<1x23xf32> to vector<2x23xf32>
    %12 = arith.addf %9, %11 : vector<2x23xf32>
    %c0_12 = arith.constant 0 : index
    %c0_13 = arith.constant 0 : index
    %13 = vector.load %arg6[%c0_12, %c0_13] : memref<2x23xf32, #tpu.memory_space<vmem>>, vector<2x23xf32>
    tpu.vector_store %arg6[%c0_12, %c0_13], %12 {strides = array<i32>} : memref<2x23xf32, #tpu.memory_space<vmem>>, vector<2x23xf32>,
    return
  }
  func.func @transform_0(%arg0: i32) -> (i32, i32) {
    %c0_i32 = arith.constant 0 : i32
    %c0_i32_0 = arith.constant 0 : i32
    return %arg0, %c0_i32 : i32, i32
  }
  func.func @transform_1(%arg0: i32) -> (i32, i32) {
    %c0_i32 = arith.constant 0 : i32
    %c0_i32_0 = arith.constant 0 : i32
    %c0_i32_1 = arith.constant 0 : i32
    return %c0_i32, %c0_i32_0 : i32, i32
  }
  func.func @transform_2(%arg0: i32) -> (i32, i32) {
    %c0_i32 = arith.constant 0 : i32
    %c0_i32_0 = arith.constant 0 : i32
    %c0_i32_1 = arith.constant 0 : i32
    return %c0_i32, %c0_i32_0 : i32, i32
  }
  func.func @transform_3(%arg0: i32) -> (i32, i32) {
    %c0_i32 = arith.constant 0 : i32
    %c0_i32_0 = arith.constant 0 : i32
    %c0_i32_1 = arith.constant 0 : i32
    return %c0_i32, %c0_i32_0 : i32, i32
  }
  func.func @transform_4(%arg0: i32) -> (i32, i32) {
    %c0_i32 = arith.constant 0 : i32
    %c0_i32_0 = arith.constant 0 : i32
    %c0_i32_1 = arith.constant 0 : i32
    return %c0_i32, %c0_i32_0 : i32, i32
  }
  func.func @transform_5(%arg0: i32) -> (i32, i32) {
    %c0_i32 = arith.constant 0 : i32
    %c0_i32_0 = arith.constant 0 : i32
    return %arg0, %c0_i32 : i32, i32
  }
  func.func @transform_6(%arg0: i32) -> (i32, i32) {
    %c0_i32 = arith.constant 0 : i32
    %c0_i32_0 = arith.constant 0 : i32
    return %arg0, %c0_i32 : i32, i32
  }
}

</mosaic_0001>

<llo_original>
// kernel: pose_discriminator.1
$region0: #{pose_discriminator.1}
  #allocation0 [shape = 'u32[]', space=smem, size = 0x4, offset = 0x4, fixed_abs, tag = 'smem constant byte address 0x4 - core index']
  #allocation1 [shape = 'u32[144,128]{1,0:T(1,128)}', space=vmem, size = 0x12000, scoped, tag = 'internal scratch']
  %s0 = inlined_call_operand.vmem [shape: f32[2,207], index: 0, kind: input, shape index: {}]
  %s1 = inlined_call_operand.vmem [shape: bf16[207,736], index: 1, kind: input, shape index: {}]
  %s2 = inlined_call_operand.vmem [shape: f32[1,736], index: 2, kind: input, shape index: {}]
  %s3 = inlined_call_operand.vmem [shape: bf16[207,23], index: 3, kind: input, shape index: {}]
  %s4 = inlined_call_operand.vmem [shape: f32[1,23], index: 4, kind: input, shape index: {}]
  %s5 = inlined_call_operand.hbm [shape: f32[2,23], index: 5, kind: output, shape index: {0}]
  %s6 = inlined_call_operand.vmem [shape: f32[2,736], index: 6, kind: output, shape index: {1}]
  %7 = xla_tuple %s5, %s6
  %s8 = sld [smem:[#allocation0]]
  $region38: #{pose_discriminator.1} parent=0
    _
  %s10 = ssub.s32 1, %s8
  %s11 = scalar_select 0, %s10, %s8
  $region1: #{pose_discriminator.1} parent=0
    #allocation2 [shape = 'u8[1024]{0}', space=vmem, size = 0x400, scoped, tag = 'output window, operand 0, single buffered']
    #allocation3 [shape = 's32[1]{0}', space=sflag, size = 0x4, scoped, tag = 'scoped memory for pose_discriminator.1']
    %12 = vsyncpa [#allocation3], 0
    // Predicated region
    $region2: #{pose_discriminator.1} parent=1 // pred_check
      _
    $region3: #{pose_discriminator.1} parent=1 // pred_check_branch
      %14 = sbr.rel (0) target = $region5
    $region4: #{pose_discriminator.1} parent=1 // pred_region
      _
    $region5: #{pose_discriminator.1} parent=1 // pred_fallthru
      _
    // Predicated region
    $region6: #{pose_discriminator.1} parent=1 // pred_check
      _
    $region7: #{pose_discriminator.1} parent=1 // pred_check_branch
      %16 = sbr.rel (0) target = $region9
    $region8: #{pose_discriminator.1} parent=1 // pred_region
      _
    $region9: #{pose_discriminator.1} parent=1 // pred_fallthru
      _
    // Predicated region
    $region10: #{pose_discriminator.1} parent=1 // pred_check
      _
    $region11: #{pose_discriminator.1} parent=1 // pred_check_branch
      %18 = sbr.rel (0) target = $region13
    $region12: #{pose_discriminator.1} parent=1 // pred_region
      _
    $region13: #{pose_discriminator.1} parent=1 // pred_fallthru
      _
    // Predicated region
    $region14: #{pose_discriminator.1} parent=1 // pred_check
      _
    $region15: #{pose_discriminator.1} parent=1 // pred_check_branch
      %20 = sbr.rel (0) target = $region17
    $region16: #{pose_discriminator.1} parent=1 // pred_region
      _
    $region17: #{pose_discriminator.1} parent=1 // pred_fallthru
      _
    // Predicated region
    $region18: #{pose_discriminator.1} parent=1 // pred_check
      _
    $region19: #{pose_discriminator.1} parent=1 // pred_check_branch
      %22 = sbr.rel (0) target = $region21
    $region20: #{pose_discriminator.1} parent=1 // pred_region
      _
    $region21: #{pose_discriminator.1} parent=1 // pred_fallthru
      _
    %v24 = vld [vmem:[%s0] sm:$0xf]
    %v27 = vunpack.c.l.s4 1983009808
    %v28 = vunpack.c.0.s8 %v27
    %v29 = vlaneseq
    %v30 = vshrl.u32 %v29, 7
    %v31 = vsub.s32 %v28, %v30
    %v32 = vrot.slane %v24, %v31
    %v33 = vcombine.high %v32, %v32
    %v36 = vpack.c.bf16 %v32, %v32
    %v37 = vpack.c.bf16 %v33, %v33
    %v38 = vld [vmem:[%s1] sm:$0xff]
    %v39 = vld [vmem:[%s1 + $0x8] sm:$0xff]
    %v40 = vld [vmem:[%s1 + $0x10] sm:$0xff]
    %v41 = vld [vmem:[%s1 + $0x18] sm:$0xff]
    %v42 = vld [vmem:[%s1 + $0x20] sm:$0xff]
    %v43 = vld [vmem:[%s1 + $0x28] sm:$0xff]
    %v44 = vld [vmem:[%s1 + $0x30] sm:$0xff]
    %v45 = vld [vmem:[%s1 + $0x38] sm:$0xff]
    %v46 = vld [vmem:[%s1 + $0x40] sm:$0xff]
    %v47 = vld [vmem:[%s1 + $0x48] sm:$0xff]
    %v48 = vld [vmem:[%s1 + $0x50] sm:$0xff]
    %v49 = vld [vmem:[%s1 + $0x58] sm:$0xff]
    %v50 = vld [vmem:[%s1 + $0x60] sm:$0xff]
    %v51 = vld [vmem:[%s1 + $0x68] sm:$0xff]
    %v52 = vld [vmem:[%s1 + $0x70] sm:$0xff]
    %v53 = vld [vmem:[%s1 + $0x78] sm:$0xff]
    %v54 = vld [vmem:[%s1 + $0x80] sm:$0xff]
    %v55 = vld [vmem:[%s1 + $0x88] sm:$0xff]
    %v56 = vld [vmem:[%s1 + $0x90] sm:$0xff]
    %v57 = vld [vmem:[%s1 + $0x98] sm:$0xff]
    %v58 = vld [vmem:[%s1 + $0xa0] sm:$0xff]
    %v59 = vld [vmem:[%s1 + $0xa8] sm:$0xff]
    %v60 = vld [vmem:[%s1 + $0xb0] sm:$0xff]
    %v61 = vld [vmem:[%s1 + $0xb8] sm:$0xff]
    %v62 = vld [vmem:[%s1 + $0xc0] sm:$0xff]
    %v63 = vld [vmem:[%s1 + $0xc8] sm:$0xff]
    %v64 = vld [vmem:[%s1 + $0xd0] sm:$0xff]
    %v65 = vld [vmem:[%s1 + $0xd8] sm:$0xff]
    %v66 = vld [vmem:[%s1 + $0xe0] sm:$0xff]
    %v67 = vld [vmem:[%s1 + $0xe8] sm:$0xff]
    %v68 = vld [vmem:[%s1 + $0xf0] sm:$0xff]
    %v69 = vld [vmem:[%s1 + $0xf8] sm:$0xff]
    %v70 = vld [vmem:[%s1 + $0x100] sm:$0xff]
    %v71 = vld [vmem:[%s1 + $0x108] sm:$0xff]
    %v72 = vld [vmem:[%s1 + $0x110] sm:$0xff]
    %v73 = vld [vmem:[%s1 + $0x118] sm:$0xff]
    %v74 = vld [vmem:[%s1 + $0x120] sm:$0xff]
    %v75 = vld [vmem:[%s1 + $0x128] sm:$0xff]
    %v76 = vld [vmem:[%s1 + $0x130] sm:$0xff]
    %v77 = vld [vmem:[%s1 + $0x138] sm:$0xff]
    %v78 = vld [vmem:[%s1 + $0x140] sm:$0xff]
    %v79 = vld [vmem:[%s1 + $0x148] sm:$0xff]
    %v80 = vld [vmem:[%s1 + $0x150] sm:$0xff]
    %v81 = vld [vmem:[%s1 + $0x158] sm:$0xff]
    %v82 = vld [vmem:[%s1 + $0x160] sm:$0xff]
    %v83 = vld [vmem:[%s1 + $0x168] sm:$0xff]
    %v84 = vld [vmem:[%s1 + $0x170] sm:$0xff]
    %v85 = vld [vmem:[%s1 + $0x178] sm:$0xff]
    %v86 = vld [vmem:[%s1 + $0x180] sm:$0xff]
    %v87 = vld [vmem:[%s1 + $0x188] sm:$0xff]
    %v88 = vld [vmem:[%s1 + $0x190] sm:$0xff]
    %v89 = vld [vmem:[%s1 + $0x198] sm:$0xff]
    %v90 = vld [vmem:[%s1 + $0x1a0] sm:$0xff]
    %v91 = vld [vmem:[%s1 + $0x1a8] sm:$0xff]
    %v92 = vld [vmem:[%s1 + $0x1b0] sm:$0xff]
    %v93 = vld [vmem:[%s1 + $0x1b8] sm:$0xff]
    %v94 = vld [vmem:[%s1 + $0x1c0] sm:$0xff]
    %v95 = vld [vmem:[%s1 + $0x1c8] sm:$0xff]
    %v96 = vld [vmem:[%s1 + $0x1d0] sm:$0xff]
    %v97 = vld [vmem:[%s1 + $0x1d8] sm:$0xff]
    %v98 = vld [vmem:[%s1 + $0x1e0] sm:$0xff]
    %v99 = vld [vmem:[%s1 + $0x1e8] sm:$0xff]
    %v100 = vld [vmem:[%s1 + $0x1f0] sm:$0xff]
    %v101 = vld [vmem:[%s1 + $0x1f8] sm:$0xff]
    %v102 = vld [vmem:[%s1 + $0x200] sm:$0xff]
    %v103 = vld [vmem:[%s1 + $0x208] sm:$0xff]
    %v104 = vld [vmem:[%s1 + $0x210] sm:$0xff]
    %v105 = vld [vmem:[%s1 + $0x218] sm:$0xff]
    %v106 = vld [vmem:[%s1 + $0x220] sm:$0xff]
    %v107 = vld [vmem:[%s1 + $0x228] sm:$0xff]
    %v108 = vld [vmem:[%s1 + $0x230] sm:$0xff]
    %v109 = vld [vmem:[%s1 + $0x238] sm:$0xff]
    %v110 = vld [vmem:[%s1 + $0x240] sm:$0xff]
    %v111 = vld [vmem:[%s1 + $0x248] sm:$0xff]
    %v112 = vld [vmem:[%s1 + $0x250] sm:$0xff]
    %v113 = vld [vmem:[%s1 + $0x258] sm:$0xff]
    %v114 = vld [vmem:[%s1 + $0x260] sm:$0xff]
    %v115 = vld [vmem:[%s1 + $0x268] sm:$0xff]
    %v116 = vld [vmem:[%s2] sm:$0x3f]
    %v118 = vlaneseq
    %v119 = vshrl.u32 %v118, 7
    %v120 = vsub.s32 0, %v119
    %v121 = vrot.slane %v116, %v120
    %v122 = vlaneseq
    %v123 = vshrl.u32 %v122, 7
    %v124 = vsub.s32 1, %v123
    %v125 = vrot.slane %v116, %v124
    %v126 = vlaneseq
    %v127 = vshrl.u32 %v126, 7
    %v128 = vsub.s32 2, %v127
    %v129 = vrot.slane %v116, %v128
    %v130 = vlaneseq
    %v131 = vshrl.u32 %v130, 7
    %v132 = vsub.s32 3, %v131
    %v133 = vrot.slane %v116, %v132
    %v134 = vlaneseq
    %v135 = vshrl.u32 %v134, 7
    %v136 = vsub.s32 4, %v135
    %v137 = vrot.slane %v116, %v136
    %v138 = vlaneseq
    %v139 = vshrl.u32 %v138, 7
    %v140 = vsub.s32 5, %v139
    %v141 = vrot.slane %v116, %v140
    %v226 = vunpack.c.l.b16 %v38
    %v227 = vunpack.c.h.b16 %v38
    %v228 = vunpack.c.l.b16 %v39
    %v229 = vunpack.c.h.b16 %v39
    %v230 = vunpack.c.l.b16 %v40
    %v231 = vunpack.c.h.b16 %v40
    %v232 = vunpack.c.l.b16 %v41
    %v233 = vunpack.c.h.b16 %v41
    %v234 = vunpack.c.l.b16 %v42
    %v235 = vunpack.c.h.b16 %v42
    %v236 = vunpack.c.l.b16 %v43
    %v237 = vunpack.c.h.b16 %v43
    %v238 = vunpack.c.l.b16 %v44
    %v239 = vunpack.c.h.b16 %v44
    %v240 = vunpack.c.l.b16 %v45
    %v241 = vunpack.c.h.b16 %v45
    %v242 = vunpack.c.l.b16 %v46
    %v243 = vunpack.c.h.b16 %v46
    %v244 = vunpack.c.l.b16 %v47
    %v245 = vunpack.c.h.b16 %v47
    %v246 = vunpack.c.l.b16 %v48
    %v247 = vunpack.c.h.b16 %v48
    %v248 = vunpack.c.l.b16 %v49
    %v249 = vunpack.c.h.b16 %v49
    %v250 = vunpack.c.l.b16 %v50
    %v251 = vunpack.c.h.b16 %v50
    %v252 = vunpack.c.l.b16 %v51
    %v253 = vunpack.c.h.b16 %v51
    %v254 = vunpack.c.l.b16 %v52
    %v255 = vunpack.c.h.b16 %v52
    %v256 = vunpack.c.l.b16 %v53
    %v257 = vunpack.c.h.b16 %v53
    %v258 = vunpack.c.l.b16 %v54
    %v259 = vunpack.c.h.b16 %v54
    %v260 = vunpack.c.l.b16 %v55
    %v261 = vunpack.c.h.b16 %v55
    %v262 = vunpack.c.l.b16 %v56
    %v263 = vunpack.c.h.b16 %v56
    %v264 = vunpack.c.l.b16 %v57
    %v265 = vunpack.c.h.b16 %v57
    %v266 = vunpack.c.l.b16 %v58
    %v267 = vunpack.c.h.b16 %v58
    %v268 = vunpack.c.l.b16 %v59
    %v269 = vunpack.c.h.b16 %v59
    %v270 = vunpack.c.l.b16 %v60
    %v271 = vunpack.c.h.b16 %v60
    %v272 = vunpack.c.l.b16 %v61
    %v273 = vunpack.c.h.b16 %v61
    %v274 = vunpack.c.l.b16 %v62
    %v275 = vunpack.c.h.b16 %v62
    %v276 = vunpack.c.l.b16 %v63
    %v277 = vunpack.c.h.b16 %v63
    %v278 = vunpack.c.l.b16 %v64
    %v279 = vunpack.c.h.b16 %v64
    %v280 = vunpack.c.l.b16 %v65
    %v281 = vunpack.c.h.b16 %v65
    %v282 = vunpack.c.l.b16 %v66
    %v283 = vunpack.c.h.b16 %v66
    %v284 = vunpack.c.l.b16 %v67
    %v285 = vunpack.c.h.b16 %v67
    %v286 = vunpack.c.l.b16 %v68
    %v287 = vunpack.c.h.b16 %v68
    %v288 = vunpack.c.l.b16 %v69
    %v289 = vunpack.c.h.b16 %v69
    %v290 = vunpack.c.l.b16 %v70
    %v291 = vunpack.c.h.b16 %v70
    %v292 = vunpack.c.l.b16 %v71
    %v293 = vunpack.c.h.b16 %v71
    %v294 = vunpack.c.l.b16 %v72
    %v295 = vunpack.c.h.b16 %v72
    %v296 = vunpack.c.l.b16 %v73
    %v297 = vunpack.c.h.b16 %v73
    %v298 = vunpack.c.l.b16 %v74
    %v299 = vunpack.c.h.b16 %v74
    %v300 = vunpack.c.l.b16 %v75
    %v301 = vunpack.c.h.b16 %v75
    %v302 = vunpack.c.l.b16 %v76
    %v303 = vunpack.c.h.b16 %v76
    %v304 = vunpack.c.l.b16 %v77
    %v305 = vunpack.c.h.b16 %v77
    %v306 = vunpack.c.l.b16 %v78
    %v307 = vunpack.c.h.b16 %v78
    %v308 = vunpack.c.l.b16 %v79
    %v309 = vunpack.c.h.b16 %v79
    %v310 = vunpack.c.l.b16 %v80
    %v311 = vunpack.c.h.b16 %v80
    %v312 = vunpack.c.l.b16 %v81
    %v313 = vunpack.c.h.b16 %v81
    %v314 = vunpack.c.l.b16 %v82
    %v315 = vunpack.c.h.b16 %v82
    %v316 = vunpack.c.l.b16 %v83
    %v317 = vunpack.c.h.b16 %v83
    %v318 = vunpack.c.l.b16 %v84
    %v319 = vunpack.c.h.b16 %v84
    %v320 = vunpack.c.l.b16 %v85
    %v321 = vunpack.c.h.b16 %v85
    %v322 = vunpack.c.l.b16 %v86
    %v323 = vunpack.c.h.b16 %v86
    %v324 = vunpack.c.l.b16 %v87
    %v325 = vunpack.c.h.b16 %v87
    %v326 = vunpack.c.l.b16 %v88
    %v327 = vunpack.c.h.b16 %v88
    %v328 = vunpack.c.l.b16 %v89
    %v329 = vunpack.c.h.b16 %v89
    %v330 = vunpack.c.l.b16 %v90
    %v331 = vunpack.c.h.b16 %v90
    %v332 = vunpack.c.l.b16 %v91
    %v333 = vunpack.c.h.b16 %v91
    %v334 = vunpack.c.l.b16 %v92
    %v335 = vunpack.c.h.b16 %v92
    %v336 = vunpack.c.l.b16 %v93
    %v337 = vunpack.c.h.b16 %v93
    %v338 = vunpack.c.l.b16 %v94
    %v339 = vunpack.c.h.b16 %v94
    %v340 = vunpack.c.l.b16 %v95
    %v341 = vunpack.c.h.b16 %v95
    %v342 = vunpack.c.l.b16 %v96
    %v343 = vunpack.c.h.b16 %v96
    %v344 = vunpack.c.l.b16 %v97
    %v345 = vunpack.c.h.b16 %v97
    %v346 = vunpack.c.l.b16 %v98
    %v347 = vunpack.c.h.b16 %v98
    %v348 = vunpack.c.l.b16 %v99
    %v349 = vunpack.c.h.b16 %v99
    %v350 = vunpack.c.l.b16 %v100
    %v351 = vunpack.c.h.b16 %v100
    %v352 = vunpack.c.l.b16 %v101
    %v353 = vunpack.c.h.b16 %v101
    %v354 = vunpack.c.l.b16 %v102
    %v355 = vunpack.c.h.b16 %v102
    %v356 = vunpack.c.l.b16 %v103
    %v357 = vunpack.c.h.b16 %v103
    %v358 = vunpack.c.l.b16 %v104
    %v359 = vunpack.c.h.b16 %v104
    %v360 = vunpack.c.l.b16 %v105
    %v361 = vunpack.c.h.b16 %v105
    %v362 = vunpack.c.l.b16 %v106
    %v363 = vunpack.c.h.b16 %v106
    %v364 = vunpack.c.l.b16 %v107
    %v365 = vunpack.c.h.b16 %v107
    %v366 = vunpack.c.l.b16 %v108
    %v367 = vunpack.c.h.b16 %v108
    %v368 = vunpack.c.l.b16 %v109
    %v369 = vunpack.c.h.b16 %v109
    %v370 = vunpack.c.l.b16 %v110
    %v371 = vunpack.c.h.b16 %v110
    %v372 = vunpack.c.l.b16 %v111
    %v373 = vunpack.c.h.b16 %v111
    %v374 = vunpack.c.l.b16 %v112
    %v375 = vunpack.c.h.b16 %v112
    %v376 = vunpack.c.l.b16 %v113
    %v377 = vunpack.c.h.b16 %v113
    %v378 = vunpack.c.l.b16 %v114
    %v379 = vunpack.c.h.b16 %v114
    %v380 = vunpack.c.l.b16 %v115
    %v381 = vunpack.c.h.b16 %v115
    %v382 = vpack.c.b16 %v232, %v226
    %v383 = vpack.c.b16 %v233, %v227
    %v384 = vpack.c.b16 %v234, %v228
    %v385 = vpack.c.b16 %v235, %v229
    %v386 = vpack.c.b16 %v236, %v230
    %v387 = vpack.c.b16 %v237, %v231
    %v388 = vpack.c.b16 %v244, %v238
    %v389 = vpack.c.b16 %v245, %v239
    %v390 = vpack.c.b16 %v246, %v240
    %v391 = vpack.c.b16 %v247, %v241
    %v392 = vpack.c.b16 %v248, %v242
    %v393 = vpack.c.b16 %v249, %v243
    %v394 = vpack.c.b16 %v256, %v250
    %v395 = vpack.c.b16 %v257, %v251
    %v396 = vpack.c.b16 %v258, %v252
    %v397 = vpack.c.b16 %v259, %v253
    %v398 = vpack.c.b16 %v260, %v254
    %v399 = vpack.c.b16 %v261, %v255
    %v400 = vpack.c.b16 %v268, %v262
    %v401 = vpack.c.b16 %v269, %v263
    %v402 = vpack.c.b16 %v270, %v264
    %v403 = vpack.c.b16 %v271, %v265
    %v404 = vpack.c.b16 %v272, %v266
    %v405 = vpack.c.b16 %v273, %v267
    %v406 = vpack.c.b16 %v280, %v274
    %v407 = vpack.c.b16 %v281, %v275
    %v408 = vpack.c.b16 %v282, %v276
    %v409 = vpack.c.b16 %v283, %v277
    %v410 = vpack.c.b16 %v284, %v278
    %v411 = vpack.c.b16 %v285, %v279
    %v412 = vpack.c.b16 %v292, %v286
    %v413 = vpack.c.b16 %v293, %v287
    %v414 = vpack.c.b16 %v294, %v288
    %v415 = vpack.c.b16 %v295, %v289
    %v416 = vpack.c.b16 %v296, %v290
    %v417 = vpack.c.b16 %v297, %v291
    %v418 = vpack.c.b16 %v304, %v298
    %v419 = vpack.c.b16 %v305, %v299
    %v420 = vpack.c.b16 %v306, %v300
    %v421 = vpack.c.b16 %v307, %v301
    %v422 = vpack.c.b16 %v308, %v302
    %v423 = vpack.c.b16 %v309, %v303
    %v424 = vpack.c.b16 %v316, %v310
    %v425 = vpack.c.b16 %v317, %v311
    %v426 = vpack.c.b16 %v318, %v312
    %v427 = vpack.c.b16 %v319, %v313
    %v428 = vpack.c.b16 %v320, %v314
    %v429 = vpack.c.b16 %v321, %v315
    %v430 = vpack.c.b16 %v328, %v322
    %v431 = vpack.c.b16 %v329, %v323
    %v432 = vpack.c.b16 %v330, %v324
    %v433 = vpack.c.b16 %v331, %v325
    %v434 = vpack.c.b16 %v332, %v326
    %v435 = vpack.c.b16 %v333, %v327
    %v436 = vpack.c.b16 %v340, %v334
    %v437 = vpack.c.b16 %v341, %v335
    %v438 = vpack.c.b16 %v342, %v336
    %v439 = vpack.c.b16 %v343, %v337
    %v440 = vpack.c.b16 %v344, %v338
    %v441 = vpack.c.b16 %v345, %v339
    %v442 = vpack.c.b16 %v352, %v346
    %v443 = vpack.c.b16 %v353, %v347
    %v444 = vpack.c.b16 %v354, %v348
    %v445 = vpack.c.b16 %v355, %v349
    %v446 = vpack.c.b16 %v356, %v350
    %v447 = vpack.c.b16 %v357, %v351
    %v448 = vpack.c.b16 %v364, %v358
    %v449 = vpack.c.b16 %v365, %v359
    %v450 = vpack.c.b16 %v366, %v360
    %v451 = vpack.c.b16 %v367, %v361
    %v452 = vpack.c.b16 %v368, %v362
    %v453 = vpack.c.b16 %v369, %v363
    %v454 = vpack.c.b16 %v376, %v370
    %v455 = vpack.c.b16 %v377, %v371
    %v456 = vpack.c.b16 %v378, %v372
    %v457 = vpack.c.b16 %v379, %v373
    %v458 = vpack.c.b16 %v380, %v374
    %v459 = vpack.c.b16 %v381, %v375
    %vm532 = vcmask 646144
    %v534 = vsel %vm532, %v37, 0
    %vm536 = vcmask 1046528
    %vm537 = vcmask 1047552
    %v538 = vsel %vm536, 4294967295, 65535
    %v539 = vsel %vm537, %v538, 0
    %v541 = vand.u32 %v454, %v539
    %v544 = vand.u32 %v455, %v539
    %v547 = vand.u32 %v456, %v539
    %v550 = vand.u32 %v457, %v539
    %v553 = vand.u32 %v458, %v539
    %v556 = vand.u32 %v459, %v539
    %558 = vmatprep.subr.bf16.mxu0 %v383
    %559 = vmatpush1.bf16.msra.mxu0 %v382
    %560 = vmatprep.subr.bf16.mxu0 %v389
    %561 = vmatpush1.bf16.msra.mxu0 %v388
    %562 = vmatprep.subr.bf16.mxu0 %v395
    %563 = vmatpush1.bf16.msra.mxu0 %v394
    %564 = vmatprep.subr.bf16.mxu0 %v401
    %565 = vmatpush1.bf16.msra.mxu0 %v400
    %566 = vmatprep.subr.bf16.mxu0 %v407
    %567 = vmatpush1.bf16.msra.mxu0 %v406
    %568 = vmatprep.subr.bf16.mxu0 %v413
    %569 = vmatpush1.bf16.msra.mxu0 %v412
    %570 = vmatprep.subr.bf16.mxu0 %v419
    %571 = vmatpush1.bf16.msra.mxu0 %v418
    %572 = vmatprep.subr.bf16.mxu0 %v425
    %573 = vmatpush1.bf16.msra.mxu0 %v424
    %574 = vmatprep.subr.bf16.mxu0 %v431
    %575 = vmatpush1.bf16.msra.mxu0 %v430
    %576 = vmatprep.subr.bf16.mxu0 %v437
    %577 = vmatpush1.bf16.msra.mxu0 %v436
    %578 = vmatprep.subr.bf16.mxu0 %v443
    %579 = vmatpush1.bf16.msra.mxu0 %v442
    %580 = vmatprep.subr.bf16.mxu0 %v449
    %581 = vmatpush1.bf16.msra.mxu0 %v448
    %582 = vmatprep.subr.bf16.mxu0 %v544
    %583 = vmatpush1.bf16.msra.mxu0 %v541
    %584 = vmatprep.subr.bf16.mxu0 0
    %585 = vmatpush1.bf16.msra.mxu0 0
    %586 = vmatprep.subr.bf16.mxu0 0
    %587 = vmatpush1.bf16.msra.mxu0 0
    %588 = vmatprep.subr.bf16.mxu0 0
    %589 = vmatpush1.bf16.msra.mxu0 0
    %590 = vmatprep.mubr.bf16.mxu0 %v534
    %591 = vmatmul.mubr.bf16.gmra.mrb[0].mxu0 %v36
    %v592 = vpop.f32.mrb[0].mxu0
    %v593 = vadd.f32 %v121, %v592
    %v594 = vpop.f32.mrb[0].mxu0
    %v595 = vadd.f32 %v125, %v594
    %v596 = vpop.f32.mrb[0].mxu0
    %v597 = vpop.f32.mrb[0].mxu0
    %598 = vdwg.mxu0
    %599 = vmatprep.subr.bf16.mxu0 %v385
    %600 = vmatpush1.bf16.msra.mxu0 %v384
    %601 = vmatprep.subr.bf16.mxu0 %v391
    %602 = vmatpush1.bf16.msra.mxu0 %v390
    %603 = vmatprep.subr.bf16.mxu0 %v397
    %604 = vmatpush1.bf16.msra.mxu0 %v396
    %605 = vmatprep.subr.bf16.mxu0 %v403
    %606 = vmatpush1.bf16.msra.mxu0 %v402
    %607 = vmatprep.subr.bf16.mxu0 %v409
    %608 = vmatpush1.bf16.msra.mxu0 %v408
    %609 = vmatprep.subr.bf16.mxu0 %v415
    %610 = vmatpush1.bf16.msra.mxu0 %v414
    %611 = vmatprep.subr.bf16.mxu0 %v421
    %612 = vmatpush1.bf16.msra.mxu0 %v420
    %613 = vmatprep.subr.bf16.mxu0 %v427
    %614 = vmatpush1.bf16.msra.mxu0 %v426
    %615 = vmatprep.subr.bf16.mxu0 %v433
    %616 = vmatpush1.bf16.msra.mxu0 %v432
    %617 = vmatprep.subr.bf16.mxu0 %v439
    %618 = vmatpush1.bf16.msra.mxu0 %v438
    %619 = vmatprep.subr.bf16.mxu0 %v445
    %620 = vmatpush1.bf16.msra.mxu0 %v444
    %621 = vmatprep.subr.bf16.mxu0 %v451
    %622 = vmatpush1.bf16.msra.mxu0 %v450
    %623 = vmatprep.subr.bf16.mxu0 %v550
    %624 = vmatpush1.bf16.msra.mxu0 %v547
    %625 = vmatprep.subr.bf16.mxu0 0
    %626 = vmatpush1.bf16.msra.mxu0 0
    %627 = vmatprep.subr.bf16.mxu0 0
    %628 = vmatpush1.bf16.msra.mxu0 0
    %629 = vmatprep.subr.bf16.mxu0 0
    %630 = vmatpush1.bf16.msra.mxu0 0
    %631 = vmatprep.mubr.bf16.mxu0 %v534
    %632 = vmatmul.mubr.bf16.gmra.mrb[0].mxu0 %v36
    %v633 = vpop.f32.mrb[0].mxu0
    %v634 = vadd.f32 %v129, %v633
    %v635 = vpop.f32.mrb[0].mxu0
    %v636 = vadd.f32 %v133, %v635
    %v637 = vpop.f32.mrb[0].mxu0
    %v638 = vpop.f32.mrb[0].mxu0
    %639 = vdwg.mxu0
    %640 = vmatprep.subr.bf16.mxu0 %v387
    %641 = vmatpush1.bf16.msra.mxu0 %v386
    %642 = vmatprep.subr.bf16.mxu0 %v393
    %643 = vmatpush1.bf16.msra.mxu0 %v392
    %644 = vmatprep.subr.bf16.mxu0 %v399
    %645 = vmatpush1.bf16.msra.mxu0 %v398
    %646 = vmatprep.subr.bf16.mxu0 %v405
    %647 = vmatpush1.bf16.msra.mxu0 %v404
    %648 = vmatprep.subr.bf16.mxu0 %v411
    %649 = vmatpush1.bf16.msra.mxu0 %v410
    %650 = vmatprep.subr.bf16.mxu0 %v417
    %651 = vmatpush1.bf16.msra.mxu0 %v416
    %652 = vmatprep.subr.bf16.mxu0 %v423
    %653 = vmatpush1.bf16.msra.mxu0 %v422
    %654 = vmatprep.subr.bf16.mxu0 %v429
    %655 = vmatpush1.bf16.msra.mxu0 %v428
    %656 = vmatprep.subr.bf16.mxu0 %v435
    %657 = vmatpush1.bf16.msra.mxu0 %v434
    %658 = vmatprep.subr.bf16.mxu0 %v441
    %659 = vmatpush1.bf16.msra.mxu0 %v440
    %660 = vmatprep.subr.bf16.mxu0 %v447
    %661 = vmatpush1.bf16.msra.mxu0 %v446
    %662 = vmatprep.subr.bf16.mxu0 %v453
    %663 = vmatpush1.bf16.msra.mxu0 %v452
    %664 = vmatprep.subr.bf16.mxu0 %v556
    %665 = vmatpush1.bf16.msra.mxu0 %v553
    %666 = vmatprep.subr.bf16.mxu0 0
    %667 = vmatpush1.bf16.msra.mxu0 0
    %668 = vmatprep.subr.bf16.mxu0 0
    %669 = vmatpush1.bf16.msra.mxu0 0
    %670 = vmatprep.subr.bf16.mxu0 0
    %671 = vmatpush1.bf16.msra.mxu0 0
    %672 = vmatprep.mubr.bf16.mxu0 %v534
    %673 = vmatmul.mubr.bf16.gmra.mrb[0].mxu0 %v36
    %v674 = vpop.f32.mrb[0].mxu0
    %v675 = vadd.f32 %v137, %v674
    %v676 = vpop.f32.mrb[0].mxu0
    %v677 = vadd.f32 %v141, %v676
    %v678 = vpop.f32.mrb[0].mxu0
    %v679 = vpop.f32.mrb[0].mxu0
    %680 = vdwg.mxu0
    %v687 = vcombine.low %v593, %v595
    %v688 = vcombine.low %v634, %v636
    %v690 = vunpack.c.l.s4 1983009808
    %v691 = vunpack.c.0.s8 %v690
    %v692 = vlaneseq
    %v693 = vshrl.u32 %v692, 7
    %v694 = vsub.s32 %v691, %v693
    %v695 = vrot.slane %v687, %v694
    %v697 = vunpack.c.l.s4 1983009808
    %v698 = vunpack.c.0.s8 %v697
    %v699 = vlaneseq
    %v700 = vshrl.u32 %v699, 7
    %v701 = vsub.s32 %v698, %v700
    %v702 = vrot.slane %v688, %v701
    %v703 = vcombine.low %v695, %v702
    %v704 = vcombine.low %v675, %v677
    %v706 = vunpack.c.l.s4 1983009808
    %v707 = vunpack.c.0.s8 %v706
    %v708 = vlaneseq
    %v709 = vshrl.u32 %v708, 7
    %v710 = vsub.s32 %v707, %v709
    %v711 = vrot.slane %v704, %v710
    %714 = vst [vmem:[%s6] sm:$0xff] %v703
    %vm715 = vcmask 1041408
    %vm716 = vcmask 781314
    %vm717 = vmor %vm716, %vm715
    %718 = vst.msk [vmem:[%s6 + $0x8] sm:$0xf] %vm717, %v711
    %v719 = vld [vmem:[%s3] sm:$0xf]
    %v720 = vld [vmem:[%s3 + $0x4] sm:$0xf]
    %v721 = vld [vmem:[%s3 + $0x8] sm:$0xf]
    %v722 = vld [vmem:[%s3 + $0xc] sm:$0xf]
    %v723 = vld [vmem:[%s3 + $0x10] sm:$0xf]
    %v724 = vld [vmem:[%s3 + $0x14] sm:$0xf]
    %v725 = vld [vmem:[%s3 + $0x18] sm:$0xf]
    %v726 = vld [vmem:[%s3 + $0x1c] sm:$0xf]
    %v727 = vld [vmem:[%s3 + $0x20] sm:$0xf]
    %v728 = vld [vmem:[%s3 + $0x24] sm:$0xf]
    %v729 = vld [vmem:[%s3 + $0x28] sm:$0xf]
    %v730 = vld [vmem:[%s3 + $0x2c] sm:$0xf]
    %v731 = vld [vmem:[%s3 + $0x30] sm:$0xf]
    %v732 = vld [vmem:[%s3 + $0x34] sm:$0xf]
    %v733 = vld [vmem:[%s3 + $0x38] sm:$0xf]
    %v734 = vld [vmem:[%s3 + $0x3c] sm:$0xf]
    %v735 = vld [vmem:[%s3 + $0x40] sm:$0xf]
    %v736 = vld [vmem:[%s3 + $0x44] sm:$0xf]
    %v737 = vld [vmem:[%s3 + $0x48] sm:$0xf]
    %v738 = vld [vmem:[%s3 + $0x4c] sm:$0xf]
    %v739 = vld [vmem:[%s3 + $0x50] sm:$0xf]
    %v740 = vld [vmem:[%s3 + $0x54] sm:$0xf]
    %v741 = vld [vmem:[%s3 + $0x58] sm:$0xf]
    %v742 = vld [vmem:[%s3 + $0x5c] sm:$0xf]
    %v743 = vld [vmem:[%s3 + $0x60] sm:$0xf]
    %v744 = vld [vmem:[%s3 + $0x64] sm:$0xf]
    %v745 = vld [vmem:[%s4] sm:$0x1]
    %v747 = vlaneseq
    %v748 = vshrl.u32 %v747, 7
    %v749 = vsub.s32 0, %v748
    %v750 = vrot.slane %v745, %v749
    %v778 = vunpack.c.l.b16 %v719
    %v779 = vunpack.c.l.b16 %v720
    %v780 = vunpack.c.l.b16 %v721
    %v781 = vunpack.c.l.b16 %v722
    %v782 = vunpack.c.l.b16 %v723
    %v783 = vunpack.c.l.b16 %v724
    %v784 = vunpack.c.l.b16 %v725
    %v785 = vunpack.c.l.b16 %v726
    %v786 = vunpack.c.l.b16 %v727
    %v787 = vunpack.c.l.b16 %v728
    %v788 = vunpack.c.l.b16 %v729
    %v789 = vunpack.c.l.b16 %v730
    %v790 = vunpack.c.l.b16 %v731
    %v791 = vunpack.c.l.b16 %v732
    %v792 = vunpack.c.l.b16 %v733
    %v793 = vunpack.c.l.b16 %v734
    %v794 = vunpack.c.l.b16 %v735
    %v795 = vunpack.c.l.b16 %v736
    %v796 = vunpack.c.l.b16 %v737
    %v797 = vunpack.c.l.b16 %v738
    %v798 = vunpack.c.l.b16 %v739
    %v799 = vunpack.c.l.b16 %v740
    %v800 = vunpack.c.l.b16 %v741
    %v801 = vunpack.c.l.b16 %v742
    %v802 = vunpack.c.l.b16 %v743
    %v803 = vunpack.c.l.b16 %v744
    %v804 = vpack.c.b16 %v779, %v778
    %v805 = vpack.c.b16 %v781, %v780
    %v806 = vpack.c.b16 %v783, %v782
    %v807 = vpack.c.b16 %v785, %v784
    %v808 = vpack.c.b16 %v787, %v786
    %v809 = vpack.c.b16 %v789, %v788
    %v810 = vpack.c.b16 %v791, %v790
    %v811 = vpack.c.b16 %v793, %v792
    %v812 = vpack.c.b16 %v795, %v794
    %v813 = vpack.c.b16 %v797, %v796
    %v814 = vpack.c.b16 %v799, %v798
    %v815 = vpack.c.b16 %v801, %v800
    %v816 = vpack.c.b16 %v803, %v802
    %v830 = vand.u32 %v816, %v539
    %832 = vmatprep.subr.bf16.mxu0 0
    %833 = vmatpush1.bf16.msra.mxu0 %v804
    %834 = vmatprep.subr.bf16.mxu0 0
    %835 = vmatpush1.bf16.msra.mxu0 %v805
    %836 = vmatprep.subr.bf16.mxu0 0
    %837 = vmatpush1.bf16.msra.mxu0 %v806
    %838 = vmatprep.subr.bf16.mxu0 0
    %839 = vmatpush1.bf16.msra.mxu0 %v807
    %840 = vmatprep.subr.bf16.mxu0 0
    %841 = vmatpush1.bf16.msra.mxu0 %v808
    %842 = vmatprep.subr.bf16.mxu0 0
    %843 = vmatpush1.bf16.msra.mxu0 %v809
    %844 = vmatprep.subr.bf16.mxu0 0
    %845 = vmatpush1.bf16.msra.mxu0 %v810
    %846 = vmatprep.subr.bf16.mxu0 0
    %847 = vmatpush1.bf16.msra.mxu0 %v811
    %848 = vmatprep.subr.bf16.mxu0 0
    %849 = vmatpush1.bf16.msra.mxu0 %v812
    %850 = vmatprep.subr.bf16.mxu0 0
    %851 = vmatpush1.bf16.msra.mxu0 %v813
    %852 = vmatprep.subr.bf16.mxu0 0
    %853 = vmatpush1.bf16.msra.mxu0 %v814
    %854 = vmatprep.subr.bf16.mxu0 0
    %855 = vmatpush1.bf16.msra.mxu0 %v815
    %856 = vmatprep.subr.bf16.mxu0 0
    %857 = vmatpush1.bf16.msra.mxu0 %v830
    %858 = vmatprep.subr.bf16.mxu0 0
    %859 = vmatpush1.bf16.msra.mxu0 0
    %860 = vmatprep.subr.bf16.mxu0 0
    %861 = vmatpush1.bf16.msra.mxu0 0
    %862 = vmatprep.subr.bf16.mxu0 0
    %863 = vmatpush1.bf16.msra.mxu0 0
    %864 = vmatprep.mubr.bf16.mxu0 %v534
    %865 = vmatmul.mubr.bf16.gmra.mrb[0].mxu0 %v36
    %v866 = vpop.f32.mrb[0].mxu0
    %v867 = vadd.f32 %v750, %v866
    %v868 = vpop.f32.mrb[0].mxu0
    %v869 = vpop.f32.mrb[0].mxu0
    %v870 = vpop.f32.mrb[0].mxu0
    %871 = vdwg.mxu0
    %vm872 = vcmask 181248
    %873 = vst.msk [vmem:[#allocation2] sm:$0x3] %vm872, %v867
    // Predicated region
    $region22: #{pose_discriminator.1} parent=1 // pred_check
      _
    $region23: #{pose_discriminator.1} parent=1 // pred_check_branch
      %875 = sbr.rel (0) target = $region25
    $region24: #{pose_discriminator.1} parent=1 // pred_region
      %s877 = ssub.s32 32, 32
      %878 = vsyncadd [#allocation3], %s877
      %s880 = sshll.u32 [#allocation2], 4
      %s881 = int_to_ptr.vmem [resolvable:$true] %s880
      %883 = dma.vmem_to_hbm [thread:$0]  %s881, 32, %s5, [#allocation3]
    $region25: #{pose_discriminator.1} parent=1 // pred_fallthru
      _
    // Predicated region
    $region26: #{pose_discriminator.1} parent=1 // pred_check
      _
    $region27: #{pose_discriminator.1} parent=1 // pred_check_branch
      %885 = sbr.rel (0) target = $region29
    $region28: #{pose_discriminator.1} parent=1 // pred_region
      _
    $region29: #{pose_discriminator.1} parent=1 // pred_fallthru
      _
    // Predicated region
    $region30: #{pose_discriminator.1} parent=1 // pred_check
      _
    $region31: #{pose_discriminator.1} parent=1 // pred_check_branch
      %887 = sbr.rel (0) target = $region33
    $region32: #{pose_discriminator.1} parent=1 // pred_region
      %888 = dma.done [#allocation3], 32
    $region33: #{pose_discriminator.1} parent=1 // pred_fallthru
      _
    // Predicated region
    $region34: #{pose_discriminator.1} parent=1 // pred_check
      _
    $region35: #{pose_discriminator.1} parent=1 // pred_check_branch
      %890 = sbr.rel (0) target = $region37
    $region36: #{pose_discriminator.1} parent=1 // pred_region
      _
    $region37: #{pose_discriminator.1} parent=1 // pred_fallthru
      _
    %891 = vsyncpa [#allocation3], 1

</llo_original>
